<compile_context>
chip_gen: v7x
topology: tpu7x:2x2x1
jax: 0.10.0
libtpu: 0.0.40
codegen_flags: <defaults>
</compile_context>

<pallas_src>
import functools

import jax
import jax.numpy as jnp
import numpy as np
from jax.experimental import pallas as pl
from jax.experimental.pallas import tpu as pltpu


def _round_up(x, m):
    return ((x + m - 1) // m) * m


def _mean_and_conv_kernel(x_ref, w_ref, b_ref, conv_ref, ds_ref, *, c_in_pad, cast_bf16):
    # x_ref   : (K*C_in_pad, TN) im2col tile; row k*C_in_pad+ic, col n = t*B + b holds
    #           x[b, ic, t*stride + k]  (zero-padded channels / tail columns)
    # w_ref   : (C_out_pad, K*C_in_pad) with w2[co, k*C_in_pad + ic] = w[co, ic, k]
    # b_ref   : (C_out_pad, 1)
    # conv_ref: (C_out_pad, TN) conv output tile, column n = t*B + b
    # ds_ref  : (C_in_pad , TN) nearest-downsample tile (== k=0 tap rows of x_ref)
    xcol = x_ref[...]
    if cast_bf16:
        conv = jnp.dot(w_ref[...], xcol.astype(jnp.bfloat16),
                       preferred_element_type=jnp.float32)
    else:
        conv = jnp.dot(w_ref[...], xcol, preferred_element_type=jnp.float32,
                       precision=jax.lax.Precision.HIGHEST)
    conv_ref[...] = (conv + b_ref[...]).astype(conv_ref.dtype)
    # Nearest downsample (src = t*stride) == the k=0 tap row-group; store it directly.
    ds_ref[...] = xcol[:c_in_pad, :].astype(ds_ref.dtype)


def mean_and_conv(x, w, b, *, stride, tn=512, use_bf16_matmul=False):
    B, c_in, L = x.shape
    c_out, c_in_w, K = w.shape
    assert c_in == c_in_w
    l_out = (L - K) // stride + 1
    assert l_out >= 1

    c_in_pad = _round_up(c_in, 8)
    c_out_pad = _round_up(c_out, 8)
    krows = K * c_in_pad

    # ---- tile-size / grid selection -------------------------------------------------
    n_valid = l_out * B
    tn = max(128, (int(tn) // 128) * 128)           # lane multiple
    while tn > 128 and -(-n_valid // tn) < 2:       # shrink rather than a 1-tile grid
        tn = max(128, (tn // 2 // 128) * 128)
    n_tiles = -(-n_valid // tn)
    if n_tiles >= 2 and n_tiles % 2 == 1:           # even tile count -> both v7x TCs busy
        n_tiles += 1
    n_pad = n_tiles * tn

    # ---- wrapper-side layout plumbing (gather + pad; conv compute stays in-kernel) ---
    # Per-tap stack: xstack[k*C_in_pad + ic, t*B + b] = x[b, ic, t*stride + k]
    taps = jnp.stack(
        [x[:, :, k:k + stride * (l_out - 1) + 1:stride] for k in range(K)], axis=0
    )                                               # (K, B, C_in, L_out)
    taps = jnp.transpose(taps, (0, 2, 3, 1))        # (K, C_in, L_out, B)
    taps = jnp.pad(taps, ((0, 0), (0, c_in_pad - c_in), (0, 0), (0, 0)))
    xstack = taps.reshape(krows, n_valid)
    xstack = jnp.pad(xstack, ((0, 0), (0, n_pad - n_valid)))

    # Weight -> (C_out_pad, K*C_in_pad), k-major / ic-minor to match xstack's row layout.
    w2 = jnp.pad(w, ((0, c_out_pad - c_out), (0, c_in_pad - c_in), (0, 0)))
    w2 = jnp.transpose(w2, (0, 2, 1)).reshape(c_out_pad, krows)
    if use_bf16_matmul:
        w2 = w2.astype(jnp.bfloat16)
    b2 = jnp.pad(b, (0, c_out_pad - c_out)).reshape(c_out_pad, 1)

    # ---- explicit VMEM budget: all blocks x2 pipeline buffers + headroom --------------
    block_bytes = 4 * (krows * tn + c_out_pad * krows + c_out_pad
                       + c_out_pad * tn + c_in_pad * tn)
    vmem_limit = min(max(2 * block_bytes + (4 << 20), 16 << 20), 64 << 20)

    kernel_fn = functools.partial(_mean_and_conv_kernel, c_in_pad=c_in_pad,
                                  cast_bf16=use_bf16_matmul)

    conv_flat, ds_flat = pl.pallas_call(
        kernel_fn,
        out_shape=(jax.ShapeDtypeStruct((c_out_pad, n_pad), x.dtype),
                   jax.ShapeDtypeStruct((c_in_pad, n_pad), x.dtype)),
        grid_spec=pltpu.PrefetchScalarGridSpec(
            num_scalar_prefetch=0,
            grid=(n_tiles,),
            in_specs=[
                # Per-tile input window: VMEM footprint is O(TN) and the DMA is pipelined.
                pl.BlockSpec((krows, tn), lambda i: (0, i)),
                # Weight / bias are tiny and stay resident (constant index_map).
                pl.BlockSpec((c_out_pad, krows), lambda i: (0, 0)),
                pl.BlockSpec((c_out_pad, 1), lambda i: (0, 0)),
            ],
            out_specs=[
                pl.BlockSpec((c_out_pad, tn), lambda i: (0, i)),
                pl.BlockSpec((c_in_pad, tn), lambda i: (0, i)),
            ],
        ),
        compiler_params=pltpu.CompilerParams(
            dimension_semantics=("parallel",),
            vmem_limit_bytes=vmem_limit,
        ),
    )(xstack, w2, b2)

    # Un-fold (n = t*B + b) -> (B, ., L_out), drop channel padding, concat along channels.
    conv = conv_flat[:c_out, :n_valid].reshape(c_out, l_out, B).transpose(2, 0, 1)
    ds = ds_flat[:c_in, :n_valid].reshape(c_in, l_out, B).transpose(2, 0, 1)
    return jnp.concatenate([conv, ds], axis=1)


def ref_forward(x, w, b, *, stride):
    """Plain-JAX reference of the PyTorch forward (for correctness check)."""
    B, c_in, L = x.shape
    c_out, _, K = w.shape
    l_out = (L - K) // stride + 1
    cols = jnp.stack(
        [x[:, :, k:k + stride * (l_out - 1) + 1:stride] for k in range(K)], axis=-1
    )  # (B, C_in, L_out, K)
    conv = jnp.einsum("bclk,ock->bol", cols, w,
                      precision=jax.lax.Precision.HIGHEST) + b[None, :, None]
    ds = x[:, :, ::stride][:, :, :l_out]  # nearest downsample then slice
    return jnp.concatenate([conv, ds], axis=1)


if __name__ == "__main__":
    key = jax.random.PRNGKey(0)
    kx, kw, kb = jax.random.split(key, 3)

    # small shapes consistent with the module: Conv1d(inp=4, output=8, kernel=3, stride=2)
    B, C_IN, L = 2, 4, 16
    C_OUT, K, STRIDE = 8, 3, 2

    x = jax.random.normal(kx, (B, C_IN, L), dtype=jnp.float32)
    fan_in = C_IN * K
    bound = 1.0 / (fan_in ** 0.5)
    w = jax.random.uniform(kw, (C_OUT, C_IN, K), minval=-bound, maxval=bound,
                           dtype=jnp.float32)
    bias = jax.random.uniform(kb, (C_OUT,), minval=-bound, maxval=bound,
                              dtype=jnp.float32)

    out = mean_and_conv(x, w, bias, stride=STRIDE)
    out = jax.block_until_ready(out)

    ref = ref_forward(x, w, bias, stride=STRIDE)
    assert out.shape == (B, C_OUT + C_IN, (L - K) // STRIDE + 1)
    np.testing.assert_allclose(np.asarray(out), np.asarray(ref), rtol=1e-5, atol=1e-5)

    print("KERNEL_OK")
</pallas_src>

<mosaic_0001>
module attributes {stable_mosaic.version = 11 : i64} {
  func.func @_mean_and_conv_kernel(%arg0: i32, %arg1: memref<24x128xf32, #tpu.memory_space<vmem>>, %arg2: memref<8x24xf32, #tpu.memory_space<vmem>>, %arg3: memref<8x1xf32, #tpu.memory_space<vmem>>, %arg4: memref<8x128xf32, #tpu.memory_space<vmem>>, %arg5: memref<8x128xf32, #tpu.memory_space<vmem>>) attributes {dimension_semantics = [#tpu.dimension_semantics<parallel>], iteration_bounds = array<i64: 1>, scalar_prefetch = 0 : i64, scratch_operands = 0 : i64, tpu.core_type = #tpu.core_type<tc>, window_params = [{transform_indices = @transform_0, window_bounds = array<i64: 24, 128>}, {pipeline_mode = #tpu.pipeline_mode<synchronous>, transform_indices = @transform_1, window_bounds = array<i64: 8, 24>}, {pipeline_mode = #tpu.pipeline_mode<synchronous>, transform_indices = @transform_2, window_bounds = array<i64: 8, 1>}, {transform_indices = @transform_3, window_bounds = array<i64: 8, 128>}, {transform_indices = @transform_4, window_bounds = array<i64: 8, 128>}]} {
    %c0 = arith.constant 0 : index
    %c0_0 = arith.constant 0 : index
    %0 = vector.load %arg1[%c0, %c0_0] : memref<24x128xf32, #tpu.memory_space<vmem>>, vector<24x128xf32>
    %c0_1 = arith.constant 0 : index
    %c0_2 = arith.constant 0 : index
    %1 = vector.load %arg2[%c0_1, %c0_2] : memref<8x24xf32, #tpu.memory_space<vmem>>, vector<8x24xf32>
    %cst = arith.constant dense<0.000000e+00> : vector<8x128xf32>
    %2 = tpu.matmul %1, %0, %cst {dimension_numbers = #tpu.dot_dimension_numbers<[1], [0], [0], [1], [0, 0, 1, 1], [], []>, precision = #tpu.contract_precision<fp32>} : vector<8x24xf32>, vector<24x128xf32>, vector<8x128xf32> -> vector<8x128xf32>
    %c0_3 = arith.constant 0 : index
    %c0_4 = arith.constant 0 : index
    %3 = vector.load %arg3[%c0_3, %c0_4] : memref<8x1xf32, #tpu.memory_space<vmem>>, vector<8x1xf32>
    %4 = vector.broadcast %3 : vector<8x1xf32> to vector<8x128xf32>
    %5 = arith.addf %2, %4 : vector<8x128xf32>
    %c0_5 = arith.constant 0 : index
    %c0_6 = arith.constant 0 : index
    %6 = vector.load %arg4[%c0_5, %c0_6] : memref<8x128xf32, #tpu.memory_space<vmem>>, vector<8x128xf32>
    tpu.vector_store %arg4[%c0_5, %c0_6], %5 {strides = array<i32>} : memref<8x128xf32, #tpu.memory_space<vmem>>, vector<8x128xf32>,
    %7 = vector.extract_strided_slice %0 {offsets = [0, 0], sizes = [8, 128], strides = [1, 1]} : vector<24x128xf32> to vector<8x128xf32>
    %c0_7 = arith.constant 0 : index
    %c0_8 = arith.constant 0 : index
    %8 = vector.load %arg5[%c0_7, %c0_8] : memref<8x128xf32, #tpu.memory_space<vmem>>, vector<8x128xf32>
    tpu.vector_store %arg5[%c0_7, %c0_8], %7 {strides = array<i32>} : memref<8x128xf32, #tpu.memory_space<vmem>>, vector<8x128xf32>,
    return
  }
  func.func @transform_0(%arg0: i32) -> (i32, i32) {
    %c0_i32 = arith.constant 0 : i32
    %c0_i32_0 = arith.constant 0 : i32
    return %c0_i32, %arg0 : i32, i32
  }
  func.func @transform_1(%arg0: i32) -> (i32, i32) {
    %c0_i32 = arith.constant 0 : i32
    %c0_i32_0 = arith.constant 0 : i32
    %c0_i32_1 = arith.constant 0 : i32
    return %c0_i32, %c0_i32_0 : i32, i32
  }
  func.func @transform_2(%arg0: i32) -> (i32, i32) {
    %c0_i32 = arith.constant 0 : i32
    %c0_i32_0 = arith.constant 0 : i32
    %c0_i32_1 = arith.constant 0 : i32
    return %c0_i32, %c0_i32_0 : i32, i32
  }
  func.func @transform_3(%arg0: i32) -> (i32, i32) {
    %c0_i32 = arith.constant 0 : i32
    %c0_i32_0 = arith.constant 0 : i32
    return %c0_i32, %arg0 : i32, i32
  }
  func.func @transform_4(%arg0: i32) -> (i32, i32) {
    %c0_i32 = arith.constant 0 : i32
    %c0_i32_0 = arith.constant 0 : i32
    return %c0_i32, %arg0 : i32, i32
  }
}

</mosaic_0001>

<llo_original>
// kernel: tpu_custom_call.1
$region0: #{tpu_custom_call.1}
  #allocation0 [shape = 'u32[]', space=smem, size = 0x4, offset = 0x4, fixed_abs, tag = 'smem constant byte address 0x4 - core index']
  #allocation1 [shape = 'u32[144,128]{1,0:T(1,128)}', space=vmem, size = 0x12000, scoped, tag = 'internal scratch']
  %s0 = inlined_call_operand.hbm [shape: f32[24,128], index: 0, kind: input, shape index: {}]
  %s1 = inlined_call_operand.vmem [shape: f32[8,24], index: 1, kind: input, shape index: {}]
  %s2 = inlined_call_operand.vmem [shape: f32[8,1], index: 2, kind: input, shape index: {}]
  %s3 = inlined_call_operand.hbm [shape: f32[8,128], index: 3, kind: output, shape index: {0}]
  %s4 = inlined_call_operand.hbm [shape: f32[8,128], index: 4, kind: output, shape index: {1}]
  %5 = xla_tuple %s3, %s4
  %s6 = sld [smem:[#allocation0]]
  $region34: #{tpu_custom_call.1} parent=0
    _
  %s8 = ssub.s32 1, %s6
  %s9 = scalar_select 0, %s8, %s6
  $region1: #{tpu_custom_call.1} parent=0
    #allocation2 [shape = 'u8[12288]{0}', space=vmem, size = 0x3000, scoped, tag = 'input window, operand 0, single buffered']
    #allocation3 [shape = 's32[1]{0}', space=sflag, size = 0x4, scoped, tag = 'scoped memory for tpu_custom_call.1']
    #allocation4 [shape = 's32[1]{0}', space=sflag, size = 0x4, scoped, tag = 'scoped memory for tpu_custom_call.1']
    #allocation5 [shape = 'u8[4096]{0}', space=vmem, size = 0x1000, scoped, tag = 'output window, operand 0, single buffered']
    #allocation6 [shape = 'u8[4096]{0}', space=vmem, size = 0x1000, scoped, tag = 'output window, operand 1, single buffered']
    #allocation7 [shape = 's32[1]{0}', space=sflag, size = 0x4, scoped, tag = 'scoped memory for tpu_custom_call.1']
    %10 = vsyncpa [#allocation3], 0
    %11 = vsyncpa [#allocation4], 0
    %12 = vsyncpa [#allocation7], 0
    // Predicated region
    $region2: #{tpu_custom_call.1} parent=1 // pred_check
      _
    $region3: #{tpu_custom_call.1} parent=1 // pred_check_branch
      %14 = sbr.rel (0) target = $region5
    $region4: #{tpu_custom_call.1} parent=1 // pred_region
      %s16 = ssub.s32 384, 384
      %17 = vsyncadd [#allocation3], %s16
      %s18 = sshll.u32 [#allocation2], 4
      %s19 = int_to_ptr.vmem [resolvable:$true] %s18
      %24 = dma.hbm_to_vmem [thread:$0]  %s0, 384, %s19, [#allocation3], 128, 128, 8
    $region5: #{tpu_custom_call.1} parent=1 // pred_fallthru
      _
    // Predicated region
    $region6: #{tpu_custom_call.1} parent=1 // pred_check
      _
    $region7: #{tpu_custom_call.1} parent=1 // pred_check_branch
      %26 = sbr.rel (0) target = $region9
    $region8: #{tpu_custom_call.1} parent=1 // pred_region
      _
    $region9: #{tpu_custom_call.1} parent=1 // pred_fallthru
      _
    // Predicated region
    $region10: #{tpu_custom_call.1} parent=1 // pred_check
      _
    $region11: #{tpu_custom_call.1} parent=1 // pred_check_branch
      %28 = sbr.rel (0) target = $region13
    $region12: #{tpu_custom_call.1} parent=1 // pred_region
      _
    $region13: #{tpu_custom_call.1} parent=1 // pred_fallthru
      _
    // Predicated region
    $region14: #{tpu_custom_call.1} parent=1 // pred_check
      _
    $region15: #{tpu_custom_call.1} parent=1 // pred_check_branch
      %30 = sbr.rel (0) target = $region17
    $region16: #{tpu_custom_call.1} parent=1 // pred_region
      %31 = dma.done [#allocation3], 384
    $region17: #{tpu_custom_call.1} parent=1 // pred_fallthru
      _
    %v32 = vld [vmem:[#allocation2] sm:$0xff]
    %v33 = vld [vmem:[#allocation2 + $0x8] sm:$0xff]
    %v34 = vld [vmem:[#allocation2 + $0x10] sm:$0xff]
    %v35 = vld [vmem:[%s1] sm:$0xff]
    %v36 = vld [vmem:[%s2] sm:$0xff]
    %38 = vset.pattern.permute.xlu0 0
    %39 = vperm.xlu0 %38, %v36
    %v40 = vpop.permute.xlu0 %39
    %vm42 = vcmask 195584
    %v44 = vsel %vm42, %v35, 0
    %46 = vmatprep.subr.mxu0 0.0
    %v47 = vand.u32 %v32, 4294901760
    %48 = vmatpush1.msra.mxu0 %v47
    %49 = vmatprep.subr.mxu0 0.0
    %v50 = vand.u32 %v33, 4294901760
    %51 = vmatpush1.msra.mxu0 %v50
    %52 = vmatprep.subr.mxu0 0.0
    %v53 = vand.u32 %v34, 4294901760
    %54 = vmatpush1.msra.mxu0 %v53
    %55 = vmatprep.subr.mxu0 0.0
    %56 = vmatpush1.msra.mxu0 0.0
    %57 = vmatprep.subr.mxu0 0.0
    %58 = vmatpush1.msra.mxu0 0.0
    %59 = vmatprep.subr.mxu0 0.0
    %60 = vmatpush1.msra.mxu0 0.0
    %61 = vmatprep.subr.mxu0 0.0
    %62 = vmatpush1.msra.mxu0 0.0
    %63 = vmatprep.subr.mxu0 0.0
    %64 = vmatpush1.msra.mxu0 0.0
    %65 = vmatprep.subr.mxu0 0.0
    %66 = vmatpush1.msra.mxu0 0.0
    %67 = vmatprep.subr.mxu0 0.0
    %68 = vmatpush1.msra.mxu0 0.0
    %69 = vmatprep.subr.mxu0 0.0
    %70 = vmatpush1.msra.mxu0 0.0
    %71 = vmatprep.subr.mxu0 0.0
    %72 = vmatpush1.msra.mxu0 0.0
    %73 = vmatprep.subr.mxu0 0.0
    %74 = vmatpush1.msra.mxu0 0.0
    %75 = vmatprep.subr.mxu0 0.0
    %76 = vmatpush1.msra.mxu0 0.0
    %77 = vmatprep.subr.mxu0 0.0
    %78 = vmatpush1.msra.mxu0 0.0
    %79 = vmatprep.subr.mxu0 0.0
    %80 = vmatpush1.msra.mxu0 0.0
    %81 = vmatprep.subr.mxu0 0.0
    %82 = vmatpush1.msra.mxu0 0.0
    %83 = vmatprep.subr.mxu0 0.0
    %84 = vmatpush1.msra.mxu0 0.0
    %85 = vmatprep.subr.mxu0 0.0
    %86 = vmatpush1.msra.mxu0 0.0
    %87 = vmatprep.subr.mxu0 0.0
    %88 = vmatpush1.msra.mxu0 0.0
    %89 = vmatprep.subr.mxu0 0.0
    %90 = vmatpush1.msra.mxu0 0.0
    %91 = vmatprep.subr.mxu0 0.0
    %92 = vmatpush1.msra.mxu0 0.0
    %93 = vmatprep.subr.mxu0 0.0
    %94 = vmatpush1.msra.mxu0 0.0
    %95 = vmatprep.subr.mxu0 0.0
    %96 = vmatpush1.msra.mxu0 0.0
    %97 = vmatprep.subr.mxu0 0.0
    %98 = vmatpush1.msra.mxu0 0.0
    %99 = vmatprep.subr.mxu0 0.0
    %100 = vmatpush1.msra.mxu0 0.0
    %101 = vmatprep.subr.mxu0 0.0
    %102 = vmatpush1.msra.mxu0 0.0
    %103 = vmatprep.subr.mxu0 0.0
    %104 = vmatpush1.msra.mxu0 0.0
    %105 = vmatprep.subr.mxu0 0.0
    %106 = vmatpush1.msra.mxu0 0.0
    %107 = vmatprep.subr.mxu0 0.0
    %108 = vmatpush1.msra.mxu0 0.0
    %109 = vmatprep.subr.mxu0 0.0
    %110 = vmatpush1.msra.mxu0 0.0
    %111 = vmatprep.subr.mxu0 0.0
    %112 = vmatpush1.msra.mxu0 0.0
    %113 = vmatprep.mubr.f32.mxu0 0.0
    %v114 = vand.u32 %v44, 4294901760
    %v115 = vsub.f32 %v44, %v114
    %v116 = vand.u32 %v115, 4294901760
    %v117 = vsub.f32 %v115, %v116
    %v118 = vand.u32 %v117, 4294901760
    %119 = vmatmul.mubr.f32.gmra.mrb[0].mxu0 %v118
    %v120 = vpop.f32.mrb[0].mxu0
    %v121 = vadd.f32 %v40, %v120
    %v122 = vpop.f32.mrb[0].mxu0
    %123 = vdwg.mxu0
    %124 = vmatprep.subr.mxu0 0.0
    %v125 = vand.u32 %v32, 4294901760
    %v126 = vsub.f32 %v32, %v125
    %v127 = vand.u32 %v126, 4294901760
    %v128 = vsub.f32 %v126, %v127
    %v129 = vand.u32 %v128, 4294901760
    %130 = vmatpush1.msra.mxu0 %v129
    %131 = vmatprep.subr.mxu0 0.0
    %v132 = vand.u32 %v33, 4294901760
    %v133 = vsub.f32 %v33, %v132
    %v134 = vand.u32 %v133, 4294901760
    %v135 = vsub.f32 %v133, %v134
    %v136 = vand.u32 %v135, 4294901760
    %137 = vmatpush1.msra.mxu0 %v136
    %138 = vmatprep.subr.mxu0 0.0
    %v139 = vand.u32 %v34, 4294901760
    %v140 = vsub.f32 %v34, %v139
    %v141 = vand.u32 %v140, 4294901760
    %v142 = vsub.f32 %v140, %v141
    %v143 = vand.u32 %v142, 4294901760
    %144 = vmatpush1.msra.mxu0 %v143
    %145 = vmatprep.subr.mxu0 0.0
    %146 = vmatpush1.msra.mxu0 0.0
    %147 = vmatprep.subr.mxu0 0.0
    %148 = vmatpush1.msra.mxu0 0.0
    %149 = vmatprep.subr.mxu0 0.0
    %150 = vmatpush1.msra.mxu0 0.0
    %151 = vmatprep.subr.mxu0 0.0
    %152 = vmatpush1.msra.mxu0 0.0
    %153 = vmatprep.subr.mxu0 0.0
    %154 = vmatpush1.msra.mxu0 0.0
    %155 = vmatprep.subr.mxu0 0.0
    %156 = vmatpush1.msra.mxu0 0.0
    %157 = vmatprep.subr.mxu0 0.0
    %158 = vmatpush1.msra.mxu0 0.0
    %159 = vmatprep.subr.mxu0 0.0
    %160 = vmatpush1.msra.mxu0 0.0
    %161 = vmatprep.subr.mxu0 0.0
    %162 = vmatpush1.msra.mxu0 0.0
    %163 = vmatprep.subr.mxu0 0.0
    %164 = vmatpush1.msra.mxu0 0.0
    %165 = vmatprep.subr.mxu0 0.0
    %166 = vmatpush1.msra.mxu0 0.0
    %167 = vmatprep.subr.mxu0 0.0
    %168 = vmatpush1.msra.mxu0 0.0
    %169 = vmatprep.subr.mxu0 0.0
    %170 = vmatpush1.msra.mxu0 0.0
    %171 = vmatprep.subr.mxu0 0.0
    %172 = vmatpush1.msra.mxu0 0.0
    %173 = vmatprep.subr.mxu0 0.0
    %174 = vmatpush1.msra.mxu0 0.0
    %175 = vmatprep.subr.mxu0 0.0
    %176 = vmatpush1.msra.mxu0 0.0
    %177 = vmatprep.subr.mxu0 0.0
    %178 = vmatpush1.msra.mxu0 0.0
    %179 = vmatprep.subr.mxu0 0.0
    %180 = vmatpush1.msra.mxu0 0.0
    %181 = vmatprep.subr.mxu0 0.0
    %182 = vmatpush1.msra.mxu0 0.0
    %183 = vmatprep.subr.mxu0 0.0
    %184 = vmatpush1.msra.mxu0 0.0
    %185 = vmatprep.subr.mxu0 0.0
    %186 = vmatpush1.msra.mxu0 0.0
    %187 = vmatprep.subr.mxu0 0.0
    %188 = vmatpush1.msra.mxu0 0.0
    %189 = vmatprep.subr.mxu0 0.0
    %190 = vmatpush1.msra.mxu0 0.0
    %191 = vmatprep.subr.mxu0 0.0
    %192 = vmatpush1.msra.mxu0 0.0
    %193 = vmatprep.subr.mxu0 0.0
    %194 = vmatpush1.msra.mxu0 0.0
    %195 = vmatprep.subr.mxu0 0.0
    %196 = vmatpush1.msra.mxu0 0.0
    %197 = vmatprep.subr.mxu0 0.0
    %198 = vmatpush1.msra.mxu0 0.0
    %199 = vmatprep.subr.mxu0 0.0
    %200 = vmatpush1.msra.mxu0 0.0
    %201 = vmatprep.subr.mxu0 0.0
    %202 = vmatpush1.msra.mxu0 0.0
    %203 = vmatprep.mubr.f32.mxu0 0.0
    %v204 = vand.u32 %v44, 4294901760
    %205 = vmatmul.mubr.f32.gmra.mrb[0].mxu0 %v204
    %v206 = vpop.f32.mrb[0].mxu0
    %v207 = vadd.f32 %v121, %v206
    %v208 = vpop.f32.mrb[0].mxu0
    %209 = vdwg.mxu0
    %210 = vmatprep.subr.mxu0 0.0
    %v211 = vand.u32 %v32, 4294901760
    %v212 = vsub.f32 %v32, %v211
    %213 = vmatpush1.msra.mxu0 %v212
    %214 = vmatprep.subr.mxu0 0.0
    %v215 = vand.u32 %v33, 4294901760
    %v216 = vsub.f32 %v33, %v215
    %217 = vmatpush1.msra.mxu0 %v216
    %218 = vmatprep.subr.mxu0 0.0
    %v219 = vand.u32 %v34, 4294901760
    %v220 = vsub.f32 %v34, %v219
    %221 = vmatpush1.msra.mxu0 %v220
    %222 = vmatprep.subr.mxu0 0.0
    %223 = vmatpush1.msra.mxu0 0.0
    %224 = vmatprep.subr.mxu0 0.0
    %225 = vmatpush1.msra.mxu0 0.0
    %226 = vmatprep.subr.mxu0 0.0
    %227 = vmatpush1.msra.mxu0 0.0
    %228 = vmatprep.subr.mxu0 0.0
    %229 = vmatpush1.msra.mxu0 0.0
    %230 = vmatprep.subr.mxu0 0.0
    %231 = vmatpush1.msra.mxu0 0.0
    %232 = vmatprep.subr.mxu0 0.0
    %233 = vmatpush1.msra.mxu0 0.0
    %234 = vmatprep.subr.mxu0 0.0
    %235 = vmatpush1.msra.mxu0 0.0
    %236 = vmatprep.subr.mxu0 0.0
    %237 = vmatpush1.msra.mxu0 0.0
    %238 = vmatprep.subr.mxu0 0.0
    %239 = vmatpush1.msra.mxu0 0.0
    %240 = vmatprep.subr.mxu0 0.0
    %241 = vmatpush1.msra.mxu0 0.0
    %242 = vmatprep.subr.mxu0 0.0
    %243 = vmatpush1.msra.mxu0 0.0
    %244 = vmatprep.subr.mxu0 0.0
    %245 = vmatpush1.msra.mxu0 0.0
    %246 = vmatprep.subr.mxu0 0.0
    %247 = vmatpush1.msra.mxu0 0.0
    %248 = vmatprep.subr.mxu0 0.0
    %249 = vmatpush1.msra.mxu0 0.0
    %250 = vmatprep.subr.mxu0 0.0
    %251 = vmatpush1.msra.mxu0 0.0
    %252 = vmatprep.subr.mxu0 0.0
    %253 = vmatpush1.msra.mxu0 0.0
    %254 = vmatprep.subr.mxu0 0.0
    %255 = vmatpush1.msra.mxu0 0.0
    %256 = vmatprep.subr.mxu0 0.0
    %257 = vmatpush1.msra.mxu0 0.0
    %258 = vmatprep.subr.mxu0 0.0
    %259 = vmatpush1.msra.mxu0 0.0
    %260 = vmatprep.subr.mxu0 0.0
    %261 = vmatpush1.msra.mxu0 0.0
    %262 = vmatprep.subr.mxu0 0.0
    %263 = vmatpush1.msra.mxu0 0.0
    %264 = vmatprep.subr.mxu0 0.0
    %265 = vmatpush1.msra.mxu0 0.0
    %266 = vmatprep.subr.mxu0 0.0
    %267 = vmatpush1.msra.mxu0 0.0
    %268 = vmatprep.subr.mxu0 0.0
    %269 = vmatpush1.msra.mxu0 0.0
    %270 = vmatprep.subr.mxu0 0.0
    %271 = vmatpush1.msra.mxu0 0.0
    %272 = vmatprep.subr.mxu0 0.0
    %273 = vmatpush1.msra.mxu0 0.0
    %274 = vmatprep.subr.mxu0 0.0
    %275 = vmatpush1.msra.mxu0 0.0
    %276 = vmatprep.subr.mxu0 0.0
    %277 = vmatpush1.msra.mxu0 0.0
    %278 = vmatprep.subr.mxu0 0.0
    %279 = vmatpush1.msra.mxu0 0.0
    %280 = vmatprep.mubr.f32.mxu0 0.0
    %v281 = vand.u32 %v44, 4294901760
    %v282 = vsub.f32 %v44, %v281
    %283 = vmatmul.mubr.f32.gmra.mrb[0].mxu0 %v282
    %v284 = vpop.f32.mrb[0].mxu0
    %v285 = vadd.f32 %v207, %v284
    %v286 = vpop.f32.mrb[0].mxu0
    %287 = vdwg.mxu0
    %288 = vmatprep.subr.mxu0 0.0
    %v289 = vand.u32 %v32, 4294901760
    %290 = vmatpush1.msra.mxu0 %v289
    %291 = vmatprep.subr.mxu0 0.0
    %v292 = vand.u32 %v33, 4294901760
    %293 = vmatpush1.msra.mxu0 %v292
    %294 = vmatprep.subr.mxu0 0.0
    %v295 = vand.u32 %v34, 4294901760
    %296 = vmatpush1.msra.mxu0 %v295
    %297 = vmatprep.subr.mxu0 0.0
    %298 = vmatpush1.msra.mxu0 0.0
    %299 = vmatprep.subr.mxu0 0.0
    %300 = vmatpush1.msra.mxu0 0.0
    %301 = vmatprep.subr.mxu0 0.0
    %302 = vmatpush1.msra.mxu0 0.0
    %303 = vmatprep.subr.mxu0 0.0
    %304 = vmatpush1.msra.mxu0 0.0
    %305 = vmatprep.subr.mxu0 0.0
    %306 = vmatpush1.msra.mxu0 0.0
    %307 = vmatprep.subr.mxu0 0.0
    %308 = vmatpush1.msra.mxu0 0.0
    %309 = vmatprep.subr.mxu0 0.0
    %310 = vmatpush1.msra.mxu0 0.0
    %311 = vmatprep.subr.mxu0 0.0
    %312 = vmatpush1.msra.mxu0 0.0
    %313 = vmatprep.subr.mxu0 0.0
    %314 = vmatpush1.msra.mxu0 0.0
    %315 = vmatprep.subr.mxu0 0.0
    %316 = vmatpush1.msra.mxu0 0.0
    %317 = vmatprep.subr.mxu0 0.0
    %318 = vmatpush1.msra.mxu0 0.0
    %319 = vmatprep.subr.mxu0 0.0
    %320 = vmatpush1.msra.mxu0 0.0
    %321 = vmatprep.subr.mxu0 0.0
    %322 = vmatpush1.msra.mxu0 0.0
    %323 = vmatprep.subr.mxu0 0.0
    %324 = vmatpush1.msra.mxu0 0.0
    %325 = vmatprep.subr.mxu0 0.0
    %326 = vmatpush1.msra.mxu0 0.0
    %327 = vmatprep.subr.mxu0 0.0
    %328 = vmatpush1.msra.mxu0 0.0
    %329 = vmatprep.subr.mxu0 0.0
    %330 = vmatpush1.msra.mxu0 0.0
    %331 = vmatprep.subr.mxu0 0.0
    %332 = vmatpush1.msra.mxu0 0.0
    %333 = vmatprep.subr.mxu0 0.0
    %334 = vmatpush1.msra.mxu0 0.0
    %335 = vmatprep.subr.mxu0 0.0
    %336 = vmatpush1.msra.mxu0 0.0
    %337 = vmatprep.subr.mxu0 0.0
    %338 = vmatpush1.msra.mxu0 0.0
    %339 = vmatprep.subr.mxu0 0.0
    %340 = vmatpush1.msra.mxu0 0.0
    %341 = vmatprep.subr.mxu0 0.0
    %342 = vmatpush1.msra.mxu0 0.0
    %343 = vmatprep.subr.mxu0 0.0
    %344 = vmatpush1.msra.mxu0 0.0
    %345 = vmatprep.subr.mxu0 0.0
    %346 = vmatpush1.msra.mxu0 0.0
    %347 = vmatprep.subr.mxu0 0.0
    %348 = vmatpush1.msra.mxu0 0.0
    %349 = vmatprep.subr.mxu0 0.0
    %350 = vmatpush1.msra.mxu0 0.0
    %351 = vmatprep.subr.mxu0 0.0
    %352 = vmatpush1.msra.mxu0 0.0
    %353 = vmatprep.subr.mxu0 0.0
    %354 = vmatpush1.msra.mxu0 0.0
    %355 = vmatprep.mubr.f32.mxu0 0.0
    %v356 = vand.u32 %v44, 4294901760
    %v357 = vsub.f32 %v44, %v356
    %v358 = vand.u32 %v357, 4294901760
    %359 = vmatmul.mubr.f32.gmra.mrb[0].mxu0 %v358
    %v360 = vpop.f32.mrb[0].mxu0
    %v361 = vadd.f32 %v285, %v360
    %v362 = vpop.f32.mrb[0].mxu0
    %363 = vdwg.mxu0
    %364 = vmatprep.subr.mxu0 0.0
    %v365 = vand.u32 %v32, 4294901760
    %v366 = vsub.f32 %v32, %v365
    %v367 = vand.u32 %v366, 4294901760
    %368 = vmatpush1.msra.mxu0 %v367
    %369 = vmatprep.subr.mxu0 0.0
    %v370 = vand.u32 %v33, 4294901760
    %v371 = vsub.f32 %v33, %v370
    %v372 = vand.u32 %v371, 4294901760
    %373 = vmatpush1.msra.mxu0 %v372
    %374 = vmatprep.subr.mxu0 0.0
    %v375 = vand.u32 %v34, 4294901760
    %v376 = vsub.f32 %v34, %v375
    %v377 = vand.u32 %v376, 4294901760
    %378 = vmatpush1.msra.mxu0 %v377
    %379 = vmatprep.subr.mxu0 0.0
    %380 = vmatpush1.msra.mxu0 0.0
    %381 = vmatprep.subr.mxu0 0.0
    %382 = vmatpush1.msra.mxu0 0.0
    %383 = vmatprep.subr.mxu0 0.0
    %384 = vmatpush1.msra.mxu0 0.0
    %385 = vmatprep.subr.mxu0 0.0
    %386 = vmatpush1.msra.mxu0 0.0
    %387 = vmatprep.subr.mxu0 0.0
    %388 = vmatpush1.msra.mxu0 0.0
    %389 = vmatprep.subr.mxu0 0.0
    %390 = vmatpush1.msra.mxu0 0.0
    %391 = vmatprep.subr.mxu0 0.0
    %392 = vmatpush1.msra.mxu0 0.0
    %393 = vmatprep.subr.mxu0 0.0
    %394 = vmatpush1.msra.mxu0 0.0
    %395 = vmatprep.subr.mxu0 0.0
    %396 = vmatpush1.msra.mxu0 0.0
    %397 = vmatprep.subr.mxu0 0.0
    %398 = vmatpush1.msra.mxu0 0.0
    %399 = vmatprep.subr.mxu0 0.0
    %400 = vmatpush1.msra.mxu0 0.0
    %401 = vmatprep.subr.mxu0 0.0
    %402 = vmatpush1.msra.mxu0 0.0
    %403 = vmatprep.subr.mxu0 0.0
    %404 = vmatpush1.msra.mxu0 0.0
    %405 = vmatprep.subr.mxu0 0.0
    %406 = vmatpush1.msra.mxu0 0.0
    %407 = vmatprep.subr.mxu0 0.0
    %408 = vmatpush1.msra.mxu0 0.0
    %409 = vmatprep.subr.mxu0 0.0
    %410 = vmatpush1.msra.mxu0 0.0
    %411 = vmatprep.subr.mxu0 0.0
    %412 = vmatpush1.msra.mxu0 0.0
    %413 = vmatprep.subr.mxu0 0.0
    %414 = vmatpush1.msra.mxu0 0.0
    %415 = vmatprep.subr.mxu0 0.0
    %416 = vmatpush1.msra.mxu0 0.0
    %417 = vmatprep.subr.mxu0 0.0
    %418 = vmatpush1.msra.mxu0 0.0
    %419 = vmatprep.subr.mxu0 0.0
    %420 = vmatpush1.msra.mxu0 0.0
    %421 = vmatprep.subr.mxu0 0.0
    %422 = vmatpush1.msra.mxu0 0.0
    %423 = vmatprep.subr.mxu0 0.0
    %424 = vmatpush1.msra.mxu0 0.0
    %425 = vmatprep.subr.mxu0 0.0
    %426 = vmatpush1.msra.mxu0 0.0
    %427 = vmatprep.subr.mxu0 0.0
    %428 = vmatpush1.msra.mxu0 0.0
    %429 = vmatprep.subr.mxu0 0.0
    %430 = vmatpush1.msra.mxu0 0.0
    %431 = vmatprep.subr.mxu0 0.0
    %432 = vmatpush1.msra.mxu0 0.0
    %433 = vmatprep.subr.mxu0 0.0
    %434 = vmatpush1.msra.mxu0 0.0
    %435 = vmatprep.subr.mxu0 0.0
    %436 = vmatpush1.msra.mxu0 0.0
    %437 = vmatprep.mubr.f32.mxu0 0.0
    %v438 = vand.u32 %v44, 4294901760
    %439 = vmatmul.mubr.f32.gmra.mrb[0].mxu0 %v438
    %v440 = vpop.f32.mrb[0].mxu0
    %v441 = vadd.f32 %v361, %v440
    %v442 = vpop.f32.mrb[0].mxu0
    %443 = vdwg.mxu0
    %444 = vmatprep.subr.mxu0 0.0
    %v445 = vand.u32 %v32, 4294901760
    %446 = vmatpush1.msra.mxu0 %v445
    %447 = vmatprep.subr.mxu0 0.0
    %v448 = vand.u32 %v33, 4294901760
    %449 = vmatpush1.msra.mxu0 %v448
    %450 = vmatprep.subr.mxu0 0.0
    %v451 = vand.u32 %v34, 4294901760
    %452 = vmatpush1.msra.mxu0 %v451
    %453 = vmatprep.subr.mxu0 0.0
    %454 = vmatpush1.msra.mxu0 0.0
    %455 = vmatprep.subr.mxu0 0.0
    %456 = vmatpush1.msra.mxu0 0.0
    %457 = vmatprep.subr.mxu0 0.0
    %458 = vmatpush1.msra.mxu0 0.0
    %459 = vmatprep.subr.mxu0 0.0
    %460 = vmatpush1.msra.mxu0 0.0
    %461 = vmatprep.subr.mxu0 0.0
    %462 = vmatpush1.msra.mxu0 0.0
    %463 = vmatprep.subr.mxu0 0.0
    %464 = vmatpush1.msra.mxu0 0.0
    %465 = vmatprep.subr.mxu0 0.0
    %466 = vmatpush1.msra.mxu0 0.0
    %467 = vmatprep.subr.mxu0 0.0
    %468 = vmatpush1.msra.mxu0 0.0
    %469 = vmatprep.subr.mxu0 0.0
    %470 = vmatpush1.msra.mxu0 0.0
    %471 = vmatprep.subr.mxu0 0.0
    %472 = vmatpush1.msra.mxu0 0.0
    %473 = vmatprep.subr.mxu0 0.0
    %474 = vmatpush1.msra.mxu0 0.0
    %475 = vmatprep.subr.mxu0 0.0
    %476 = vmatpush1.msra.mxu0 0.0
    %477 = vmatprep.subr.mxu0 0.0
    %478 = vmatpush1.msra.mxu0 0.0
    %479 = vmatprep.subr.mxu0 0.0
    %480 = vmatpush1.msra.mxu0 0.0
    %481 = vmatprep.subr.mxu0 0.0
    %482 = vmatpush1.msra.mxu0 0.0
    %483 = vmatprep.subr.mxu0 0.0
    %484 = vmatpush1.msra.mxu0 0.0
    %485 = vmatprep.subr.mxu0 0.0
    %486 = vmatpush1.msra.mxu0 0.0
    %487 = vmatprep.subr.mxu0 0.0
    %488 = vmatpush1.msra.mxu0 0.0
    %489 = vmatprep.subr.mxu0 0.0
    %490 = vmatpush1.msra.mxu0 0.0
    %491 = vmatprep.subr.mxu0 0.0
    %492 = vmatpush1.msra.mxu0 0.0
    %493 = vmatprep.subr.mxu0 0.0
    %494 = vmatpush1.msra.mxu0 0.0
    %495 = vmatprep.subr.mxu0 0.0
    %496 = vmatpush1.msra.mxu0 0.0
    %497 = vmatprep.subr.mxu0 0.0
    %498 = vmatpush1.msra.mxu0 0.0
    %499 = vmatprep.subr.mxu0 0.0
    %500 = vmatpush1.msra.mxu0 0.0
    %501 = vmatprep.subr.mxu0 0.0
    %502 = vmatpush1.msra.mxu0 0.0
    %503 = vmatprep.subr.mxu0 0.0
    %504 = vmatpush1.msra.mxu0 0.0
    %505 = vmatprep.subr.mxu0 0.0
    %506 = vmatpush1.msra.mxu0 0.0
    %507 = vmatprep.subr.mxu0 0.0
    %508 = vmatpush1.msra.mxu0 0.0
    %509 = vmatprep.subr.mxu0 0.0
    %510 = vmatpush1.msra.mxu0 0.0
    %511 = vmatprep.mubr.f32.mxu0 0.0
    %v512 = vand.u32 %v44, 4294901760
    %513 = vmatmul.mubr.f32.gmra.mrb[0].mxu0 %v512
    %v514 = vpop.f32.mrb[0].mxu0
    %v515 = vadd.f32 %v441, %v514
    %v516 = vpop.f32.mrb[0].mxu0
    %517 = vdwg.mxu0
    %518 = vst [vmem:[#allocation5] sm:$0xff] %v515
    %519 = vst [vmem:[#allocation6] sm:$0xff] %v32
    // Predicated region
    $region18: #{tpu_custom_call.1} parent=1 // pred_check
      _
    $region19: #{tpu_custom_call.1} parent=1 // pred_check_branch
      %521 = sbr.rel (0) target = $region21
    $region20: #{tpu_custom_call.1} parent=1 // pred_region
      %s523 = ssub.s32 128, 128
      %524 = vsyncadd [#allocation4], %s523
      %s526 = sshll.u32 [#allocation5], 4
      %s527 = int_to_ptr.vmem [resolvable:$true] %s526
      %529 = dma.vmem_to_hbm [thread:$0]  %s527, 128, %s3, [#allocation4]
    $region21: #{tpu_custom_call.1} parent=1 // pred_fallthru
      _
    // Predicated region
    $region22: #{tpu_custom_call.1} parent=1 // pred_check
      _
    $region23: #{tpu_custom_call.1} parent=1 // pred_check_branch
      %531 = sbr.rel (0) target = $region25
    $region24: #{tpu_custom_call.1} parent=1 // pred_region
      %s533 = ssub.s32 128, 128
      %534 = vsyncadd [#allocation7], %s533
      %s536 = sshll.u32 [#allocation6], 4
      %s537 = int_to_ptr.vmem [resolvable:$true] %s536
      %539 = dma.vmem_to_hbm [thread:$0]  %s537, 128, %s4, [#allocation7]
    $region25: #{tpu_custom_call.1} parent=1 // pred_fallthru
      _
    // Predicated region
    $region26: #{tpu_custom_call.1} parent=1 // pred_check
      _
    $region27: #{tpu_custom_call.1} parent=1 // pred_check_branch
      %541 = sbr.rel (0) target = $region29
    $region28: #{tpu_custom_call.1} parent=1 // pred_region
      %542 = dma.done [#allocation4], 128
    $region29: #{tpu_custom_call.1} parent=1 // pred_fallthru
      _
    // Predicated region
    $region30: #{tpu_custom_call.1} parent=1 // pred_check
      _
    $region31: #{tpu_custom_call.1} parent=1 // pred_check_branch
      %544 = sbr.rel (0) target = $region33
    $region32: #{tpu_custom_call.1} parent=1 // pred_region
      %545 = dma.done [#allocation7], 128
    $region33: #{tpu_custom_call.1} parent=1 // pred_fallthru
      _
    %546 = vsyncpa [#allocation3], 1
    %547 = vsyncpa [#allocation4], 1
    %548 = vsyncpa [#allocation7], 1

</llo_original>
